<compile_context>
chip_gen: v6e
topology: v6e:2x2x1
jax: 0.10.0
libtpu: 0.0.40
codegen_flags: <defaults>
</compile_context>

<pallas_src>
import functools
import math

import jax
import jax.numpy as jnp
from jax.experimental import pallas as pl
from jax.experimental.pallas import tpu as pltpu


def _layernorm(x, alpha, bias, eps=1e-6):
    # Matches the custom PyTorch LayerNorm:
    #   mu = mean(x,-1); sig = std(x,-1) (UNBIASED, N-1); out = a*(x-mu)/(sig+eps)+b
    e = x.shape[-1]
    mu = jnp.mean(x, axis=-1, keepdims=True)
    var = jnp.sum((x - mu) ** 2, axis=-1, keepdims=True) / (e - 1)
    sig = jnp.sqrt(var)
    return alpha * (x - mu) / (sig + eps) + bias


# ---------------------------------------------------------------------------
# Kernel 1: LayerNorm + fused QKV projection, lane-dense (B, S, E) outputs.
# ---------------------------------------------------------------------------
def _qkv_proj_kernel(x_ref, wqkv_ref, ln1a_ref, ln1b_ref, q_ref, k_ref, v_ref):
    x = x_ref[0]                                     # (TQ, E) f32
    E = x.shape[-1]

    ln1 = _layernorm(x, ln1a_ref[...], ln1b_ref[...])
    # One fused MXU matmul for Q, K and V (1/sqrt(hd) already folded into Q cols).
    qkv = jnp.dot(ln1.astype(wqkv_ref.dtype), wqkv_ref[...],
                  preferred_element_type=jnp.float32)          # (TQ, 3E) f32

    # Three full-lane-width stores (no per-head loop, no masked vst).
    q_ref[0] = qkv[:, 0 * E:1 * E].astype(q_ref.dtype)
    k_ref[0] = qkv[:, 1 * E:2 * E].astype(k_ref.dtype)
    v_ref[0] = qkv[:, 2 * E:3 * E].astype(v_ref.dtype)


# ---------------------------------------------------------------------------
# Kernel 2: flash-style attention + output projection + residual + FFN.
# ---------------------------------------------------------------------------
def _attn_ffn_kernel(flags_ref,                      # scalar-prefetch (SMEM) (B, n_kv)
                     x_ref, q_ref, k_ref, v_ref, bias_ref,
                     wo_ref, w1_ref, b1_ref, w2_ref, b2_ref,
                     ln2a_ref, ln2b_ref,
                     o_ref,
                     q_hm, m_sc, l_sc, acc_sc,
                     *, n_heads, head_dim):
    b = pl.program_id(0)
    kv = pl.program_id(2)
    md = q_ref.dtype                        # matmul operand dtype (bf16 or f32)
    hd = head_dim

    @pl.when(kv == 0)
    def _init():
        m_sc[...] = jnp.full(m_sc.shape, -jnp.inf, m_sc.dtype)
        l_sc[...] = jnp.zeros(l_sc.shape, l_sc.dtype)
        acc_sc[...] = jnp.zeros(acc_sc.shape, acc_sc.dtype)
        # Head-major Q built ONCE per q tile (reused across all kv steps).
        q = q_ref[0]                                            # (TQ, E)
        q_hm[...] = jnp.stack(
            [q[:, h * hd:(h + 1) * hd] for h in range(n_heads)], axis=0)

    # Skip the whole update for fully-masked key blocks (padded batches).
    @pl.when(flags_ref[b, kv] > 0)
    def _update():
        k = k_ref[0]                                            # (TK, E)
        v = v_ref[0]                                            # (TK, E)
        k_hm = jnp.stack([k[:, h * hd:(h + 1) * hd] for h in range(n_heads)], axis=0)
        v_hm = jnp.stack([v[:, h * hd:(h + 1) * hd] for h in range(n_heads)], axis=0)
        bias_kv = bias_ref[0, 0]                                # (1, TK): 0 or -1e30

        # Scores for all heads in one batched MXU matmul (f32 accumulation).
        s = jnp.einsum('hqd,hkd->hqk', q_hm[...], k_hm,
                       preferred_element_type=jnp.float32)      # (H, TQ, TK)
        s = s + bias_kv[None, :, :]                             # key-padding mask

        # Online-softmax update.
        m_prev = m_sc[...]                                      # (H, TQ, 1)
        m_new = jnp.maximum(m_prev, jnp.max(s, axis=-1, keepdims=True))
        alpha = jnp.exp(m_prev - m_new)
        p = jnp.exp(s - m_new)                                  # (H, TQ, TK) f32
        l_sc[...] = alpha * l_sc[...] + jnp.sum(p, axis=-1, keepdims=True)
        pv = jnp.einsum('hqk,hkd->hqd', p.astype(md), v_hm,
                        preferred_element_type=jnp.float32)     # (H, TQ, hd)
        acc_sc[...] = alpha * acc_sc[...] + pv
        m_sc[...] = m_new

    @pl.when(kv == pl.num_programs(2) - 1)
    def _finalize():
        inv_l = pl.reciprocal(l_sc[...], approx=True)           # EUP, nearly free
        ctx = acc_sc[...] * inv_l                               # (H, TQ, hd) f32
        # Pack heads lane-dense once per q tile, then a single dense output proj:
        # (TQ, E) @ (E, E) fills the full MXU contraction (no per-head matmuls,
        # no head-axis reduction).
        ctx_packed = jnp.concatenate([ctx[h] for h in range(n_heads)], axis=-1)
        attn = jnp.dot(ctx_packed.astype(md), wo_ref[...],
                       preferred_element_type=jnp.float32)      # (TQ, E)

        x = x_ref[0]                                            # (TQ, E) f32
        x1 = x + attn                                           # dropout = identity

        ln2 = _layernorm(x1, ln2a_ref[...], ln2b_ref[...])
        h1 = jnp.dot(ln2.astype(md), w1_ref[...],
                     preferred_element_type=jnp.float32) + b1_ref[...]
        h1 = jnp.maximum(h1, 0.0)                               # ReLU (dropout = identity)
        ff = jnp.dot(h1.astype(md), w2_ref[...],
                     preferred_element_type=jnp.float32) + b2_ref[...]

        o_ref[0] = (x1 + ff).astype(o_ref.dtype)


# ---------------------------------------------------------------------------
# VMEM sizing helpers: (8,128)-padded upper bound, clamped to chip capacity.
# ---------------------------------------------------------------------------
def _vmem_capacity_bytes():
    try:
        cap = getattr(pltpu.get_tpu_info(), "vmem_capacity_bytes", None)
        if cap:
            return int(cap)
    except Exception:
        pass
    return 128 << 20   # conservative v5e/v6e default


def _padded_block_bytes(shape):
    dims = [int(d) for d in shape] or [1]
    dims[-1] = -(-dims[-1] // 128) * 128
    if len(dims) >= 2:
        dims[-2] = -(-dims[-2] // 8) * 8
    n = 1
    for d in dims:
        n *= d
    return n * 4     # conservative: 4 B / elem even for bf16 operands


def _vmem_limit(block_shapes, scratch_shapes=()):
    need = 2 * sum(_padded_block_bytes(s) for s in block_shapes)   # double buffering
    need += sum(_padded_block_bytes(s) for s in scratch_shapes)
    need = int(1.25 * need) + (2 << 20)
    budget = _vmem_capacity_bytes() - (8 << 20)                    # v7x-safe headroom
    return max(min(need, budget), 4 << 20)


def _pick_block(S, target):
    """Largest multiple of 8 that divides S and is <= target (or S itself)."""
    if S <= target:
        return S
    for cand in range((min(S, target) // 8) * 8, 0, -8):
        if S % cand == 0:
            return cand
    return S


# ---------------------------------------------------------------------------
# One-time weight preparation (hoist out of the forward path; cache & reuse).
# ---------------------------------------------------------------------------
def prepare_encoder_params(params, n_heads, matmul_dtype=jnp.bfloat16):
    E = params["wq_t"].shape[0]
    assert E % n_heads == 0
    hd = E // n_heads
    scale = 1.0 / math.sqrt(hd)
    # Fused QKV weight; attention scale folded into the Q columns.
    wqkv = jnp.concatenate(
        [params["wq_t"] * scale, params["wk_t"], params["wv_t"]], axis=1
    ).astype(matmul_dtype)                                      # (E, 3E)
    return {
        "wqkv": wqkv,
        "wo_t": params["wo_t"].astype(matmul_dtype),            # (E, E), original layout
        "w1_t": params["w1_t"].astype(matmul_dtype),
        "b1": params["b1"].astype(jnp.float32),
        "w2_t": params["w2_t"].astype(matmul_dtype),
        "b2": params["b2"].astype(jnp.float32),
        "ln1_a": params["ln1_a"].astype(jnp.float32),
        "ln1_b": params["ln1_b"].astype(jnp.float32),
        "ln2_a": params["ln2_a"].astype(jnp.float32),
        "ln2_b": params["ln2_b"].astype(jnp.float32),
    }


# ---------------------------------------------------------------------------
# Wrapper
# ---------------------------------------------------------------------------
def encoder_block(x, mask, prep, n_heads, *, block_q=None, block_kv=None):
    """x: (B, S, E) f32; mask: (B, S), 0 => masked key.  Eval-mode forward.

    `prep` is the output of prepare_encoder_params (weights pre-fused / pre-cast).
    """
    B, S, E = x.shape
    d_ff = prep["w1_t"].shape[-1]
    assert E % n_heads == 0
    hd = E // n_heads
    md = prep["wqkv"].dtype
    ms_bytes = jnp.dtype(md).itemsize

    # Generation-aware default tiles (never full-S for large S).
    cap = _vmem_capacity_bytes()
    kv_target = 512 if cap >= (96 << 20) else 256
    block_q = _pick_block(S, 256) if block_q is None else block_q
    block_kv = _pick_block(S, kv_target) if block_kv is None else block_kv
    assert S % block_q == 0 and S % block_kv == 0, "S must be divisible by block sizes"
    assert block_q == S or block_q % 8 == 0
    assert block_kv == S or block_kv % 8 == 0
    n_q = S // block_q
    n_kv = S // block_kv

    # Additive key-padding bias, pre-blocked along the kv grid axis:
    # 0 for kept keys, -1e30 for masked keys (finite -> no NaN hazard; identical
    # softmax result to -inf for any row with at least one unmasked key).
    bias = jnp.where(mask == 0, jnp.float32(-1e30), jnp.float32(0.0))
    bias = bias.reshape(B, n_kv, 1, block_kv)
    # Per-(batch, kv-block) summary: 1 => at least one kept key, 0 => skip block.
    flags = (mask.reshape(B, n_kv, block_kv) != 0).any(axis=-1).astype(jnp.int32)

    # ---------------- kernel 1: LayerNorm + fused QKV projection ------------
    k1_blocks = [(1, block_q, E), (E, 3 * E), (1, E), (1, E),
                 (1, block_q, E), (1, block_q, E), (1, block_q, E)]
    k1_cost = pl.CostEstimate(
        flops=int(2 * B * S * E * 3 * E),
        transcendentals=0,
        bytes_accessed=int(B * S * E * 4 + 3 * E * E * ms_bytes
                           + 3 * B * S * E * ms_bytes),
    )
    q, k, v = pl.pallas_call(
        _qkv_proj_kernel,
        out_shape=(
            jax.ShapeDtypeStruct((B, S, E), md),
            jax.ShapeDtypeStruct((B, S, E), md),
            jax.ShapeDtypeStruct((B, S, E), md),
        ),
        grid=(B, n_q),
        in_specs=[
            pl.BlockSpec((1, block_q, E), lambda b, s: (b, s, 0)),   # x
            pl.BlockSpec((E, 3 * E), lambda b, s: (0, 0)),           # fused wqkv
            pl.BlockSpec((1, E), lambda b, s: (0, 0)),               # ln1 alpha
            pl.BlockSpec((1, E), lambda b, s: (0, 0)),               # ln1 bias
        ],
        out_specs=(
            pl.BlockSpec((1, block_q, E), lambda b, s: (b, s, 0)),   # q (lane-dense)
            pl.BlockSpec((1, block_q, E), lambda b, s: (b, s, 0)),   # k (lane-dense)
            pl.BlockSpec((1, block_q, E), lambda b, s: (b, s, 0)),   # v (lane-dense)
        ),
        compiler_params=pltpu.CompilerParams(
            dimension_semantics=("parallel", "parallel"),
            vmem_limit_bytes=_vmem_limit(k1_blocks)),
        cost_estimate=k1_cost,
    )(x, prep["wqkv"], prep["ln1_a"], prep["ln1_b"])

    # --------- kernel 2: flash attention + output proj + FFN + residuals ----
    k2_blocks = [(1, block_q, E), (1, block_q, E),
                 (1, block_kv, E), (1, block_kv, E),
                 (1, 1, 1, block_kv), (E, E),
                 (E, d_ff), (1, d_ff), (d_ff, E), (1, E), (1, E), (1, E),
                 (1, block_q, E)]
    k2_scratch = [(n_heads, block_q, hd), (n_heads, block_q, 1),
                  (n_heads, block_q, 1), (n_heads, block_q, hd)]
    k2_cost = pl.CostEstimate(
        flops=int(4 * B * S * S * E + 2 * B * S * E * E + 4 * B * S * E * d_ff),
        transcendentals=int(B * n_heads * S * S),
        bytes_accessed=int(2 * B * S * E * 4 + 3 * B * S * E * ms_bytes
                           + (E * E + 2 * E * d_ff) * ms_bytes),
    )
    grid_spec = pltpu.PrefetchScalarGridSpec(
        num_scalar_prefetch=1,
        grid=(B, n_q, n_kv),
        in_specs=[
            pl.BlockSpec((1, block_q, E), lambda b, qi, kv, f: (b, qi, 0)),        # x
            pl.BlockSpec((1, block_q, E), lambda b, qi, kv, f: (b, qi, 0)),        # q
            pl.BlockSpec((1, block_kv, E), lambda b, qi, kv, f: (b, kv, 0)),       # k
            pl.BlockSpec((1, block_kv, E), lambda b, qi, kv, f: (b, kv, 0)),       # v
            pl.BlockSpec((1, 1, 1, block_kv), lambda b, qi, kv, f: (b, kv, 0, 0)), # bias
            pl.BlockSpec((E, E), lambda b, qi, kv, f: (0, 0)),                     # wo
            pl.BlockSpec((E, d_ff), lambda b, qi, kv, f: (0, 0)),                  # w1
            pl.BlockSpec((1, d_ff), lambda b, qi, kv, f: (0, 0)),                  # b1
            pl.BlockSpec((d_ff, E), lambda b, qi, kv, f: (0, 0)),                  # w2
            pl.BlockSpec((1, E), lambda b, qi, kv, f: (0, 0)),                     # b2
            pl.BlockSpec((1, E), lambda b, qi, kv, f: (0, 0)),                     # ln2 alpha
            pl.BlockSpec((1, E), lambda b, qi, kv, f: (0, 0)),                     # ln2 bias
        ],
        out_specs=pl.BlockSpec((1, block_q, E), lambda b, qi, kv, f: (b, qi, 0)),
        scratch_shapes=[
            pltpu.VMEM((n_heads, block_q, hd), md),            # head-major Q (per q tile)
            pltpu.VMEM((n_heads, block_q, 1), jnp.float32),    # running max m
            pltpu.VMEM((n_heads, block_q, 1), jnp.float32),    # running denom l
            pltpu.VMEM((n_heads, block_q, hd), jnp.float32),   # running numerator acc
        ],
    )
    out = pl.pallas_call(
        functools.partial(_attn_ffn_kernel, n_heads=n_heads, head_dim=hd),
        out_shape=jax.ShapeDtypeStruct((B, S, E), x.dtype),
        grid_spec=grid_spec,
        compiler_params=pltpu.CompilerParams(
            dimension_semantics=("parallel", "parallel", "arbitrary"),
            vmem_limit_bytes=_vmem_limit(k2_blocks, k2_scratch)),
        cost_estimate=k2_cost,
    )(flags, x, q, k, v, bias, prep["wo_t"], prep["w1_t"], prep["b1"],
      prep["w2_t"], prep["b2"], prep["ln2_a"], prep["ln2_b"])
    return out


# ---------------------------------------------------------------------------
# Pure-JAX reference mirroring the PyTorch forward (eval mode).
# ---------------------------------------------------------------------------
def encoder_block_reference(x, mask, params, n_heads):
    B, S, E = x.shape
    hd = E // n_heads

    def layernorm(z, a, b, eps=1e-6):
        mu = jnp.mean(z, axis=-1, keepdims=True)
        sig = jnp.sqrt(jnp.sum((z - mu) ** 2, axis=-1, keepdims=True) / (E - 1))
        return a * (z - mu) / (sig + eps) + b

    ln1 = layernorm(x, params["ln1_a"], params["ln1_b"])
    q = ln1 @ params["wq_t"]
    k = ln1 @ params["wk_t"]
    v = ln1 @ params["wv_t"]
    q = q.reshape(B, S, n_heads, hd).transpose(0, 2, 1, 3)
    k = k.reshape(B, S, n_heads, hd).transpose(0, 2, 1, 3)
    v = v.reshape(B, S, n_heads, hd).transpose(0, 2, 1, 3)
    s = jnp.einsum("bhqd,bhkd->bhqk", q, k) / math.sqrt(hd)
    s = jnp.where(mask[:, None, None, :] == 0, -jnp.inf, s)
    p = jax.nn.softmax(s, axis=-1)
    attn = jnp.einsum("bhqk,bhkd->bhqd", p, v).transpose(0, 2, 1, 3).reshape(B, S, E)
    x1 = x + attn @ params["wo_t"]
    ln2 = layernorm(x1, params["ln2_a"], params["ln2_b"])
    ff = (jnp.maximum(ln2 @ params["w1_t"] + params["b1"], 0.0)
          @ params["w2_t"] + params["b2"])
    return x1 + ff


if __name__ == "__main__":
    B, S, E, H, D_FF = 2, 16, 32, 4, 64

    key = jax.random.PRNGKey(0)
    keys = jax.random.split(key, 10)

    def init(kk, shape, scale=0.1):
        return scale * jax.random.normal(kk, shape, dtype=jnp.float32)

    params = {
        # Linear weights stored already transposed: y = x @ W_t
        "wq_t": init(keys[0], (E, E)),
        "wk_t": init(keys[1], (E, E)),
        "wv_t": init(keys[2], (E, E)),
        "wo_t": init(keys[3], (E, E)),
        "w1_t": init(keys[4], (E, D_FF)),
        "b1":   init(keys[5], (1, D_FF)),
        "w2_t": init(keys[6], (D_FF, E)),
        "b2":   init(keys[7], (1, E)),
        # LayerNorm params (torch init: alpha=1, bias=0)
        "ln1_a": jnp.ones((1, E), jnp.float32),
        "ln1_b": jnp.zeros((1, E), jnp.float32),
        "ln2_a": jnp.ones((1, E), jnp.float32),
        "ln2_b": jnp.zeros((1, E), jnp.float32),
    }

    x = jax.random.normal(keys[8], (B, S, E), dtype=jnp.float32)
    # key-padding mask: 1 = keep, 0 = masked; keep position 0 so no row is fully
    # masked, and fully mask keys 8:16 of batch 0 so one kv block is skipped.
    mask = (jax.random.uniform(keys[9], (B, S)) > 0.3).astype(jnp.float32)
    mask = mask.at[:, 0].set(1.0)
    mask = mask.at[0, 8:].set(0.0)

    ref = encoder_block_reference(x, mask, params, n_heads=H)

    # Default bf16 MXU operands; 2x2 q/kv tiles exercise the flash-style
    # accumulation, the scalar-prefetch masked-block skip, and the parallel
    # (batch, q-tile) grid axes.  f32 accumulation / LayerNorm / softmax.
    prep_bf16 = prepare_encoder_params(params, n_heads=H)               # bf16 default
    out = encoder_block(x, mask, prep_bf16, n_heads=H, block_q=8, block_kv=8)
    out = jax.block_until_ready(out)
    assert out.shape == (B, S, E)
    assert jnp.allclose(out, ref, rtol=3e-2, atol=3e-2), "bf16 kernel mismatch vs reference"

    # f32 debug path with auto-derived (full-S at this size) tiles.
    prep_f32 = prepare_encoder_params(params, n_heads=H, matmul_dtype=jnp.float32)
    out_f32 = encoder_block(x, mask, prep_f32, n_heads=H)
    out_f32 = jax.block_until_ready(out_f32)
    assert jnp.allclose(out_f32, ref, rtol=5e-3, atol=5e-3), "f32 kernel mismatch vs reference"

    print("KERNEL_OK")
</pallas_src>

<mosaic_0001>
module attributes {stable_mosaic.version = 11 : i64} {
  func.func @_qkv_proj_kernel(%arg0: i32, %arg1: i32, %arg2: memref<1x8x32xf32, #tpu.memory_space<vmem>>, %arg3: memref<32x96xbf16, #tpu.memory_space<vmem>>, %arg4: memref<1x32xf32, #tpu.memory_space<vmem>>, %arg5: memref<1x32xf32, #tpu.memory_space<vmem>>, %arg6: memref<1x8x32xbf16, #tpu.memory_space<vmem>>, %arg7: memref<1x8x32xbf16, #tpu.memory_space<vmem>>, %arg8: memref<1x8x32xbf16, #tpu.memory_space<vmem>>) attributes {dimension_semantics = [#tpu.dimension_semantics<parallel>, #tpu.dimension_semantics<parallel>], iteration_bounds = array<i64: 2, 2>, scalar_prefetch = 0 : i64, scratch_operands = 0 : i64, tpu.core_type = #tpu.core_type<tc>, window_params = [{transform_indices = @transform_0, window_bounds = array<i64: 1, 8, 32>}, {pipeline_mode = #tpu.pipeline_mode<synchronous>, transform_indices = @transform_1, window_bounds = array<i64: 32, 96>}, {pipeline_mode = #tpu.pipeline_mode<synchronous>, transform_indices = @transform_2, window_bounds = array<i64: 1, 32>}, {pipeline_mode = #tpu.pipeline_mode<synchronous>, transform_indices = @transform_3, window_bounds = array<i64: 1, 32>}, {transform_indices = @transform_4, window_bounds = array<i64: 1, 8, 32>}, {transform_indices = @transform_5, window_bounds = array<i64: 1, 8, 32>}, {transform_indices = @transform_6, window_bounds = array<i64: 1, 8, 32>}]} {
    %c0 = arith.constant 0 : index
    %c0_0 = arith.constant 0 : index
    %c0_1 = arith.constant 0 : index
    %0 = vector.load %arg2[%c0, %c0_0, %c0_1] : memref<1x8x32xf32, #tpu.memory_space<vmem>>, vector<1x8x32xf32>
    %1 = vector.shape_cast %0 : vector<1x8x32xf32> to vector<8x32xf32>
    %c0_2 = arith.constant 0 : index
    %c0_3 = arith.constant 0 : index
    %2 = vector.load %arg4[%c0_2, %c0_3] : memref<1x32xf32, #tpu.memory_space<vmem>>, vector<1x32xf32>
    %c0_4 = arith.constant 0 : index
    %c0_5 = arith.constant 0 : index
    %3 = vector.load %arg5[%c0_4, %c0_5] : memref<1x32xf32, #tpu.memory_space<vmem>>, vector<1x32xf32>
    %cst = arith.constant dense<0.000000e+00> : vector<8xf32>
    %4 = vector.multi_reduction <add>, %1, %cst [1] : vector<8x32xf32> to vector<8xf32>
    %5 = vector.shape_cast %4 : vector<8xf32> to vector<8x1xf32>
    %cst_6 = arith.constant 3.200000e+01 : f32
    %6 = vector.broadcast %cst_6 : f32 to vector<8x1xf32>
    %7 = arith.divf %5, %6 : vector<8x1xf32>
    %8 = vector.broadcast %7 : vector<8x1xf32> to vector<8x32xf32>
    %9 = arith.subf %1, %8 : vector<8x32xf32>
    %10 = arith.mulf %9, %9 : vector<8x32xf32>
    %cst_7 = arith.constant dense<0.000000e+00> : vector<8xf32>
    %11 = vector.multi_reduction <add>, %10, %cst_7 [1] : vector<8x32xf32> to vector<8xf32>
    %12 = vector.shape_cast %11 : vector<8xf32> to vector<8x1xf32>
    %cst_8 = arith.constant 3.100000e+01 : f32
    %13 = vector.broadcast %cst_8 : f32 to vector<8x1xf32>
    %14 = arith.divf %12, %13 : vector<8x1xf32>
    %15 = math.sqrt %14 : vector<8x1xf32>
    %16 = vector.broadcast %7 : vector<8x1xf32> to vector<8x32xf32>
    %17 = arith.subf %1, %16 : vector<8x32xf32>
    %18 = vector.broadcast %2 : vector<1x32xf32> to vector<8x32xf32>
    %19 = arith.mulf %18, %17 : vector<8x32xf32>
    %cst_9 = arith.constant 9.99999997E-7 : f32
    %20 = vector.broadcast %cst_9 : f32 to vector<8x1xf32>
    %21 = arith.addf %15, %20 : vector<8x1xf32>
    %22 = vector.broadcast %21 : vector<8x1xf32> to vector<8x32xf32>
    %23 = arith.divf %19, %22 : vector<8x32xf32>
    %24 = vector.broadcast %3 : vector<1x32xf32> to vector<8x32xf32>
    %25 = arith.addf %23, %24 : vector<8x32xf32>
    %26 = arith.truncf %25 : vector<8x32xf32> to vector<8x32xbf16>
    %c0_10 = arith.constant 0 : index
    %c0_11 = arith.constant 0 : index
    %27 = vector.load %arg3[%c0_10, %c0_11] : memref<32x96xbf16, #tpu.memory_space<vmem>>, vector<32x96xbf16>
    %cst_12 = arith.constant dense<0.000000e+00> : vector<8x96xf32>
    %28 = tpu.matmul %26, %27, %cst_12 {dimension_numbers = #tpu.dot_dimension_numbers<[1], [0], [0], [1], [0, 0, 1, 1], [], []>} : vector<8x32xbf16>, vector<32x96xbf16>, vector<8x96xf32> -> vector<8x96xf32>
    %29 = vector.extract_strided_slice %28 {offsets = [0, 0], sizes = [8, 32], strides = [1, 1]} : vector<8x96xf32> to vector<8x32xf32>
    %30 = arith.truncf %29 : vector<8x32xf32> to vector<8x32xbf16>
    %c0_13 = arith.constant 0 : index
    %c0_14 = arith.constant 0 : index
    %c0_15 = arith.constant 0 : index
    %31 = vector.load %arg6[%c0_13, %c0_14, %c0_15] : memref<1x8x32xbf16, #tpu.memory_space<vmem>>, vector<1x8x32xbf16>
    %32 = vector.shape_cast %31 : vector<1x8x32xbf16> to vector<8x32xbf16>
    %33 = vector.shape_cast %30 : vector<8x32xbf16> to vector<1x8x32xbf16>
    tpu.vector_store %arg6[%c0_13, %c0_14, %c0_15], %33 {strides = array<i32>} : memref<1x8x32xbf16, #tpu.memory_space<vmem>>, vector<1x8x32xbf16>,
    %34 = vector.extract_strided_slice %28 {offsets = [0, 32], sizes = [8, 32], strides = [1, 1]} : vector<8x96xf32> to vector<8x32xf32>
    %35 = arith.truncf %34 : vector<8x32xf32> to vector<8x32xbf16>
    %c0_16 = arith.constant 0 : index
    %c0_17 = arith.constant 0 : index
    %c0_18 = arith.constant 0 : index
    %36 = vector.load %arg7[%c0_16, %c0_17, %c0_18] : memref<1x8x32xbf16, #tpu.memory_space<vmem>>, vector<1x8x32xbf16>
    %37 = vector.shape_cast %36 : vector<1x8x32xbf16> to vector<8x32xbf16>
    %38 = vector.shape_cast %35 : vector<8x32xbf16> to vector<1x8x32xbf16>
    tpu.vector_store %arg7[%c0_16, %c0_17, %c0_18], %38 {strides = array<i32>} : memref<1x8x32xbf16, #tpu.memory_space<vmem>>, vector<1x8x32xbf16>,
    %39 = vector.extract_strided_slice %28 {offsets = [0, 64], sizes = [8, 32], strides = [1, 1]} : vector<8x96xf32> to vector<8x32xf32>
    %40 = arith.truncf %39 : vector<8x32xf32> to vector<8x32xbf16>
    %c0_19 = arith.constant 0 : index
    %c0_20 = arith.constant 0 : index
    %c0_21 = arith.constant 0 : index
    %41 = vector.load %arg8[%c0_19, %c0_20, %c0_21] : memref<1x8x32xbf16, #tpu.memory_space<vmem>>, vector<1x8x32xbf16>
    %42 = vector.shape_cast %41 : vector<1x8x32xbf16> to vector<8x32xbf16>
    %43 = vector.shape_cast %40 : vector<8x32xbf16> to vector<1x8x32xbf16>
    tpu.vector_store %arg8[%c0_19, %c0_20, %c0_21], %43 {strides = array<i32>} : memref<1x8x32xbf16, #tpu.memory_space<vmem>>, vector<1x8x32xbf16>,
    return
  }
  func.func @transform_0(%arg0: i32, %arg1: i32) -> (i32, i32, i32) {
    %c0_i32 = arith.constant 0 : i32
    %c0_i32_0 = arith.constant 0 : i32
    return %arg0, %arg1, %c0_i32 : i32, i32, i32
  }
  func.func @transform_1(%arg0: i32, %arg1: i32) -> (i32, i32) {
    %c0_i32 = arith.constant 0 : i32
    %c0_i32_0 = arith.constant 0 : i32
    %c0_i32_1 = arith.constant 0 : i32
    return %c0_i32, %c0_i32_0 : i32, i32
  }
  func.func @transform_2(%arg0: i32, %arg1: i32) -> (i32, i32) {
    %c0_i32 = arith.constant 0 : i32
    %c0_i32_0 = arith.constant 0 : i32
    %c0_i32_1 = arith.constant 0 : i32
    return %c0_i32, %c0_i32_0 : i32, i32
  }
  func.func @transform_3(%arg0: i32, %arg1: i32) -> (i32, i32) {
    %c0_i32 = arith.constant 0 : i32
    %c0_i32_0 = arith.constant 0 : i32
    %c0_i32_1 = arith.constant 0 : i32
    return %c0_i32, %c0_i32_0 : i32, i32
  }
  func.func @transform_4(%arg0: i32, %arg1: i32) -> (i32, i32, i32) {
    %c0_i32 = arith.constant 0 : i32
    %c0_i32_0 = arith.constant 0 : i32
    return %arg0, %arg1, %c0_i32 : i32, i32, i32
  }
  func.func @transform_5(%arg0: i32, %arg1: i32) -> (i32, i32, i32) {
    %c0_i32 = arith.constant 0 : i32
    %c0_i32_0 = arith.constant 0 : i32
    return %arg0, %arg1, %c0_i32 : i32, i32, i32
  }
  func.func @transform_6(%arg0: i32, %arg1: i32) -> (i32, i32, i32) {
    %c0_i32 = arith.constant 0 : i32
    %c0_i32_0 = arith.constant 0 : i32
    return %arg0, %arg1, %c0_i32 : i32, i32, i32
  }
}

</mosaic_0001>

<llo_original>
// kernel: tpu_custom_call.1
$region0: #{tpu_custom_call.1}
  #allocation0 [shape = 'u32[]', space=smem, size = 0x4, offset = 0x4, fixed_abs, tag = 'smem constant byte address 0x4 - core index']
  #allocation1 [shape = 'u32[144,128]{1,0:T(1,128)}', space=vmem, size = 0x12000, scoped, tag = 'internal scratch']
  %s0 = inlined_call_operand.hbm [shape: f32[2,16,32], index: 0, kind: input, shape index: {}]
  %s1 = inlined_call_operand.hbm [shape: bf16[32,96], index: 1, kind: input, shape index: {}]
  %s2 = inlined_call_operand.vmem [shape: f32[1,32], index: 2, kind: input, shape index: {}]
  %s3 = inlined_call_operand.vmem [shape: f32[1,32], index: 3, kind: input, shape index: {}]
  %s4 = inlined_call_operand.hbm [shape: bf16[2,16,32], index: 4, kind: output, shape index: {0}]
  %s5 = inlined_call_operand.hbm [shape: bf16[2,16,32], index: 5, kind: output, shape index: {1}]
  %s6 = inlined_call_operand.hbm [shape: bf16[2,16,32], index: 6, kind: output, shape index: {2}]
  %7 = xla_tuple %s4, %s5, %s6
  %s8 = sld [smem:[#allocation0]]
  $region73: #{tpu_custom_call.1} parent=0
    _
  %s10 = ssub.s32 1, %s8
  %s11 = scalar_select 0, %s10, %s8
  $region1: #{tpu_custom_call.1} parent=0
    #allocation2 [shape = 'u8[8192]{0}', space=vmem, size = 0x2000, scoped, tag = 'input window, operand 0']
    #allocation3 [shape = 's32[2]{0}', space=sflag, size = 0x8, scoped, tag = 'scoped memory for tpu_custom_call.1']
    #allocation4 [shape = 's32[2]{0}', space=sflag, size = 0x8, scoped, tag = 'scoped memory for tpu_custom_call.1']
    #allocation5 [shape = 'u8[8192]{0}', space=vmem, size = 0x2000, scoped, tag = 'input window, operand 1, single buffered']
    #allocation6 [shape = 's32[1]{0}', space=sflag, size = 0x4, scoped, tag = 'scoped memory for tpu_custom_call.1']
    #allocation7 [shape = 'u8[4096]{0}', space=vmem, size = 0x1000, scoped, tag = 'output window, operand 0']
    #allocation8 [shape = 'u8[4096]{0}', space=vmem, size = 0x1000, scoped, tag = 'output window, operand 1']
    #allocation9 [shape = 's32[2]{0}', space=sflag, size = 0x8, scoped, tag = 'scoped memory for tpu_custom_call.1']
    #allocation10 [shape = 'u8[4096]{0}', space=vmem, size = 0x1000, scoped, tag = 'output window, operand 2']
    %12 = vsyncpa [#allocation3], 0
    %s13 = scalar_lea.sflag [#allocation3], 1
    %14 = vsyncpa %s13, 0
    %15 = vsyncpa [#allocation6], 0
    %16 = vsyncpa [#allocation4], 0
    %s17 = scalar_lea.sflag [#allocation4], 1
    %18 = vsyncpa %s17, 0
    %19 = vsyncpa [#allocation9], 0
    %s20 = scalar_lea.sflag [#allocation9], 1
    %21 = vsyncpa %s20, 0
    loop: start=0, step=1, limit=6
    $region2: #{tpu_custom_call.1} parent=1 // loop_pre_header
      _
    $region3: #{tpu_custom_call.1} parent=1 // loop_header
      %s23 = sphi 0, %s27
      %p24 = scmp.ge.s32.totalorder %s23, 6
      %s30 = sphi 0, %s42
      %s31 = sphi 0, %s38
      %s32 = sphi 0, %s30
      %s33 = sphi 0, %s31
      %s34 = sphi 0, %s32
      %s35 = sphi 0, %s33
      %s47 = sphi 0, %s49
      %s50 = sphi 0, %s47
      %s51 = sphi 0, %s50
      %s67 = sphi 0, %s51
      %s71 = sphi 0, %s71
      %s73 = sphi 0, %s71
      %s74 = sphi 0, %s73
      %s88 = sphi 0, %s74
      %s92 = sphi 0, %s92
      %s94 = sphi 0, %s92
      %s95 = sphi 0, %s94
      %s109 = sphi 0, %s95
      %s113 = sphi 0, %s113
      %s115 = sphi 0, %s113
      %s116 = sphi 0, %s115
      %s130 = sphi 0, %s116
      %s138 = sphi 0, %s140
      %s141 = sphi 0, %s138
      %s142 = sphi 0, %s141
      %s158 = sphi 0, %s142
      %s166 = sphi 0, %s168
      %s169 = sphi 0, %s166
      %s170 = sphi 0, %s169
      %s186 = sphi 0, %s170
      %s194 = sphi 0, %s196
      %s197 = sphi 0, %s194
      %s198 = sphi 0, %s197
      %s214 = sphi 0, %s198
    $region4: #{tpu_custom_call.1} parent=1 // loop_header_branch
      %26 = sbr.rel (%p24) target = $region8
    $region5: #{tpu_custom_call.1} parent=1 // loop_body
      %s28 = ssub.s32 %s23, 1
      %s29 = ssub.s32 %s23, 2
      %s36 = sadd.s32 1, %s31
      %p37 = scmp.ge.s32.totalorder %s36, 2
      %s38 = scalar_select %p37, 0, %s36
      %s39 = sadd.s32 1, %s30
      %s40 = scalar_select %p37, %s39, %s30
      %p41 = scmp.ge.s32.totalorder %s40, 2
      %s42 = scalar_select %p41, 0, %s40
      %s43 = ssub.s32 %s30, %s42
      %s44 = ssub.s32 %s31, %s38
      %s45 = sor.u32 %s43, %s44
      %p46 = scmp.eq.s32.totalorder %s45, 0
      %s48 = sadd.s32 %s47, 1
      %s49 = scalar_select %p46, %s47, %s48
      %p52 = pneg %p46
      %p53 = scmp.eq.s32.totalorder %s23, 3
      %p54 = por %p52, %p53
      %p55 = scmp.ne.s32.totalorder %s47, %s50
      %p56 = scmp.eq.s32.totalorder %s23, 0
      %p57 = por %p55, %p56
      %p58 = scmp.ne.s32.totalorder %s47, %s50
      %p59 = scmp.eq.s32.totalorder %s28, 3
      %p60 = por %p58, %p59
      %p61 = scmp.ne.s32.totalorder %s50, %s51
      %p62 = scmp.eq.s32.totalorder %s28, 0
      %p63 = por %p61, %p62
      %p64 = scmp.ne.s32.totalorder %s50, %s51
      %p65 = scmp.eq.s32.totalorder %s29, 3
      %p66 = por %p64, %p65
      %p68 = scmp.ne.s32.totalorder %s51, %s67
      %p69 = scmp.eq.s32.totalorder %s29, 0
      %p70 = por %p68, %p69
      %s72 = sadd.s32 %s71, 1
      %p75 = scmp.eq.s32.totalorder %s23, 3
      %p76 = scmp.ne.s32.totalorder %s71, %s73
      %p77 = scmp.eq.s32.totalorder %s23, 0
      %p78 = por %p76, %p77
      %p79 = scmp.ne.s32.totalorder %s71, %s73
      %p80 = scmp.eq.s32.totalorder %s28, 3
      %p81 = por %p79, %p80
      %p82 = scmp.ne.s32.totalorder %s73, %s74
      %p83 = scmp.eq.s32.totalorder %s28, 0
      %p84 = por %p82, %p83
      %p85 = scmp.ne.s32.totalorder %s73, %s74
      %p86 = scmp.eq.s32.totalorder %s29, 3
      %p87 = por %p85, %p86
      %p89 = scmp.ne.s32.totalorder %s74, %s88
      %p90 = scmp.eq.s32.totalorder %s29, 0
      %p91 = por %p89, %p90
      %s93 = sadd.s32 %s92, 1
      %p96 = scmp.eq.s32.totalorder %s23, 3
      %p97 = scmp.ne.s32.totalorder %s92, %s94
      %p98 = scmp.eq.s32.totalorder %s23, 0
      %p99 = por %p97, %p98
      %p100 = scmp.ne.s32.totalorder %s92, %s94
      %p101 = scmp.eq.s32.totalorder %s28, 3
      %p102 = por %p100, %p101
      %p103 = scmp.ne.s32.totalorder %s94, %s95
      %p104 = scmp.eq.s32.totalorder %s28, 0
      %p105 = por %p103, %p104
      %p106 = scmp.ne.s32.totalorder %s94, %s95
      %p107 = scmp.eq.s32.totalorder %s29, 3
      %p108 = por %p106, %p107
      %p110 = scmp.ne.s32.totalorder %s95, %s109
      %p111 = scmp.eq.s32.totalorder %s29, 0
      %p112 = por %p110, %p111
      %s114 = sadd.s32 %s113, 1
      %p117 = scmp.eq.s32.totalorder %s23, 3
      %p118 = scmp.ne.s32.totalorder %s113, %s115
      %p119 = scmp.eq.s32.totalorder %s23, 0
      %p120 = por %p118, %p119
      %p121 = scmp.ne.s32.totalorder %s113, %s115
      %p122 = scmp.eq.s32.totalorder %s28, 3
      %p123 = por %p121, %p122
      %p124 = scmp.ne.s32.totalorder %s115, %s116
      %p125 = scmp.eq.s32.totalorder %s28, 0
      %p126 = por %p124, %p125
      %p127 = scmp.ne.s32.totalorder %s115, %s116
      %p128 = scmp.eq.s32.totalorder %s29, 3
      %p129 = por %p127, %p128
      %p131 = scmp.ne.s32.totalorder %s116, %s130
      %p132 = scmp.eq.s32.totalorder %s29, 0
      %p133 = por %p131, %p132
      %s134 = ssub.s32 %s30, %s42
      %s135 = ssub.s32 %s31, %s38
      %s136 = sor.u32 %s134, %s135
      %p137 = scmp.eq.s32.totalorder %s136, 0
      %s139 = sadd.s32 %s138, 1
      %s140 = scalar_select %p137, %s138, %s139
      %p143 = pneg %p137
      %p144 = scmp.eq.s32.totalorder %s23, 3
      %p145 = por %p143, %p144
      %p146 = scmp.ne.s32.totalorder %s138, %s141
      %p147 = scmp.eq.s32.totalorder %s23, 0
      %p148 = por %p146, %p147
      %p149 = scmp.ne.s32.totalorder %s138, %s141
      %p150 = scmp.eq.s32.totalorder %s28, 3
      %p151 = por %p149, %p150
      %p152 = scmp.ne.s32.totalorder %s141, %s142
      %p153 = scmp.eq.s32.totalorder %s28, 0
      %p154 = por %p152, %p153
      %p155 = scmp.ne.s32.totalorder %s141, %s142
      %p156 = scmp.eq.s32.totalorder %s29, 3
      %p157 = por %p155, %p156
      %p159 = scmp.ne.s32.totalorder %s142, %s158
      %p160 = scmp.eq.s32.totalorder %s29, 0
      %p161 = por %p159, %p160
      %s162 = ssub.s32 %s30, %s42
      %s163 = ssub.s32 %s31, %s38
      %s164 = sor.u32 %s162, %s163
      %p165 = scmp.eq.s32.totalorder %s164, 0
      %s167 = sadd.s32 %s166, 1
      %s168 = scalar_select %p165, %s166, %s167
      %p171 = pneg %p165
      %p172 = scmp.eq.s32.totalorder %s23, 3
      %p173 = por %p171, %p172
      %p174 = scmp.ne.s32.totalorder %s166, %s169
      %p175 = scmp.eq.s32.totalorder %s23, 0
      %p176 = por %p174, %p175
      %p177 = scmp.ne.s32.totalorder %s166, %s169
      %p178 = scmp.eq.s32.totalorder %s28, 3
      %p179 = por %p177, %p178
      %p180 = scmp.ne.s32.totalorder %s169, %s170
      %p181 = scmp.eq.s32.totalorder %s28, 0
      %p182 = por %p180, %p181
      %p183 = scmp.ne.s32.totalorder %s169, %s170
      %p184 = scmp.eq.s32.totalorder %s29, 3
      %p185 = por %p183, %p184
      %p187 = scmp.ne.s32.totalorder %s170, %s186
      %p188 = scmp.eq.s32.totalorder %s29, 0
      %p189 = por %p187, %p188
      %s190 = ssub.s32 %s30, %s42
      %s191 = ssub.s32 %s31, %s38
      %s192 = sor.u32 %s190, %s191
      %p193 = scmp.eq.s32.totalorder %s192, 0
      %s195 = sadd.s32 %s194, 1
      %s196 = scalar_select %p193, %s194, %s195
      %p199 = pneg %p193
      %p200 = scmp.eq.s32.totalorder %s23, 3
      %p201 = por %p199, %p200
      %p202 = scmp.ne.s32.totalorder %s194, %s197
      %p203 = scmp.eq.s32.totalorder %s23, 0
      %p204 = por %p202, %p203
      %p205 = scmp.ne.s32.totalorder %s194, %s197
      %p206 = scmp.eq.s32.totalorder %s28, 3
      %p207 = por %p205, %p206
      %p208 = scmp.ne.s32.totalorder %s197, %s198
      %p209 = scmp.eq.s32.totalorder %s28, 0
      %p210 = por %p208, %p209
      %p211 = scmp.ne.s32.totalorder %s197, %s198
      %p212 = scmp.eq.s32.totalorder %s29, 3
      %p213 = por %p211, %p212
      %p215 = scmp.ne.s32.totalorder %s198, %s214
      %p216 = scmp.eq.s32.totalorder %s29, 0
      %p217 = por %p215, %p216
      %p218 = scmp.le.s32.totalorder 1, %s23
      %p219 = scmp.lt.s32.totalorder %s23, 5
      %p220 = pnand %p218, %p219
      %p221 = pneg %p220
      // Predicated region
      $region9: #{tpu_custom_call.1} parent=5 // pred_check
        _
      $region10: #{tpu_custom_call.1} parent=5 // pred_check_branch
        %223 = sbr.rel (%p220) target = $region12
      $region11: #{tpu_custom_call.1} parent=5 // pred_region
        %s224 = ssub.s32 %s23, 1
        // Predicated region
        $region13: #{tpu_custom_call.1} parent=11 // pred_check
          %p225 = pneg %p84
        $region14: #{tpu_custom_call.1} parent=11 // pred_check_branch
          %227 = sbr.rel (%p225) target = $region16
        $region15: #{tpu_custom_call.1} parent=11 // pred_region
          %s229 = ssub.s32 256, 256
          %230 = vsyncadd [#allocation6], %s229
          %s231 = sshll.u32 [#allocation5], 4
          %s232 = int_to_ptr.vmem [resolvable:$true] %s231
          %237 = dma.hbm_to_vmem [thread:$0]  %s1, 256, %s232, [#allocation6], 64, 64, 4
        $region16: #{tpu_custom_call.1} parent=11 // pred_fallthru
          _
        // Predicated region
        $region17: #{tpu_custom_call.1} parent=11 // pred_check
          %p238 = pneg %p105
        $region18: #{tpu_custom_call.1} parent=11 // pred_check_branch
          %240 = sbr.rel (%p238) target = $region20
        $region19: #{tpu_custom_call.1} parent=11 // pred_region
          _
        $region20: #{tpu_custom_call.1} parent=11 // pred_fallthru
          _
        // Predicated region
        $region21: #{tpu_custom_call.1} parent=11 // pred_check
          %p241 = pneg %p126
        $region22: #{tpu_custom_call.1} parent=11 // pred_check_branch
          %243 = sbr.rel (%p241) target = $region24
        $region23: #{tpu_custom_call.1} parent=11 // pred_region
          _
        $region24: #{tpu_custom_call.1} parent=11 // pred_fallthru
          _
      $region12: #{tpu_custom_call.1} parent=5 // pred_fallthru
        _
      %p244 = scmp.lt.s32.totalorder %s23, 4
      // Predicated region
      $region25: #{tpu_custom_call.1} parent=5 // pred_check
        %p245 = pneg %p244
      $region26: #{tpu_custom_call.1} parent=5 // pred_check_branch
        %247 = sbr.rel (%p245) target = $region28
      $region27: #{tpu_custom_call.1} parent=5 // pred_region
        // Predicated region
        $region29: #{tpu_custom_call.1} parent=27 // pred_check
          %p248 = pneg %p57
        $region30: #{tpu_custom_call.1} parent=27 // pred_check_branch
          %250 = sbr.rel (%p248) target = $region32
        $region31: #{tpu_custom_call.1} parent=27 // pred_region
          %s251 = sand.u32 %s47, 1
          %s252 = scalar_lea.sflag [#allocation3], %s251
          %s253 = sand.u32 %s47, 1
          %s254 = smul.addr %s253, 8
          %s255 = scalar_lea.vmem [#allocation2], %s254
          %s257 = ssub.s32 128, 128
          %258 = vsyncadd %s252, %s257
          %s259 = smul.addr %s30, 2
          %s260 = sadd.s32 %s31, %s259
          %s261 = smul.addr %s260, 128
          %s262 = scalar_lea.hbm %s0, %s261
          %s264 = sshll.u32 %s255, 4
          %s265 = int_to_ptr.vmem [resolvable:$true] %s264
          %267 = dma.hbm_to_vmem [thread:$0]  %s262, 128, %s265, %s252
        $region32: #{tpu_custom_call.1} parent=27 // pred_fallthru
          _
      $region28: #{tpu_custom_call.1} parent=5 // pred_fallthru
        _
      %p268 = scmp.le.s32.totalorder 1, %s23
      %p269 = scmp.lt.s32.totalorder %s23, 5
      %p270 = pnand %p268, %p269
      %p271 = pneg %p270
      // Predicated region
      $region33: #{tpu_custom_call.1} parent=5 // pred_check
        _
      $region34: #{tpu_custom_call.1} parent=5 // pred_check_branch
        %273 = sbr.rel (%p270) target = $region36
      $region35: #{tpu_custom_call.1} parent=5 // pred_region
        %s274 = ssub.s32 %s23, 1
        %s275 = sand.u32 %s50, 1
        %s276 = scalar_lea.sflag [#allocation3], %s275
        %s277 = sand.u32 %s50, 1
        %s278 = smul.addr %s277, 8
        %s279 = scalar_lea.vmem [#allocation2], %s278
        // Predicated region
        $region37: #{tpu_custom_call.1} parent=35 // pred_check
          %p280 = pneg %p63
        $region38: #{tpu_custom_call.1} parent=35 // pred_check_branch
          %282 = sbr.rel (%p280) target = $region40
        $region39: #{tpu_custom_call.1} parent=35 // pred_region
          %283 = dma.done %s276, 128
        $region40: #{tpu_custom_call.1} parent=35 // pred_fallthru
          _
        // Predicated region
        $region41: #{tpu_custom_call.1} parent=35 // pred_check
          %p284 = pneg %p84
        $region42: #{tpu_custom_call.1} parent=35 // pred_check_branch
          %286 = sbr.rel (%p284) target = $region44
        $region43: #{tpu_custom_call.1} parent=35 // pred_region
          %287 = dma.done [#allocation6], 256
        $region44: #{tpu_custom_call.1} parent=35 // pred_fallthru
          _
        %s288 = sand.u32 %s50, 1
        %s289 = scalar_lea.sflag [#allocation3], %s288
        %s290 = sand.u32 %s50, 1
        %s291 = smul.addr %s290, 8
        %s292 = scalar_lea.vmem [#allocation2], %s291
        %p293 = pneg %p63
        %p294 = pneg %p60
        %p295 = pneg %p84
        %p296 = pneg %p81
        %p297 = pneg %p105
        %p298 = pneg %p102
        %p299 = pneg %p126
        %p300 = pneg %p123
        %p301 = pneg %p154
        %p302 = pneg %p151
        %s303 = sand.u32 %s141, 1
        %s304 = scalar_lea.sflag [#allocation4], %s303
        %s305 = sand.u32 %s141, 1
        %s306 = smul.addr %s305, 4
        %s307 = scalar_lea.vmem [#allocation7], %s306
        %p308 = pneg %p182
        %p309 = pneg %p179
        %s310 = sand.u32 %s28, 1
        %s311 = scalar_lea.sflag [#allocation9], %s310
        %s312 = sand.u32 %s169, 1
        %s313 = smul.addr %s312, 4
        %s314 = scalar_lea.vmem [#allocation8], %s313
        %p315 = pneg %p210
        %p316 = pneg %p207
        %s317 = sand.u32 %s28, 1
        %s318 = scalar_lea.sflag [#allocation9], %s317
        %s319 = sand.u32 %s197, 1
        %s320 = smul.addr %s319, 4
        %s321 = scalar_lea.vmem [#allocation10], %s320
        %v323 = vld [vmem:[%s279] sm:$0xff]
        %v324 = vld [vmem:[%s2] sm:$0x1]
        %v325 = vld [vmem:[%s3] sm:$0x1]
        %vm326 = vcmask 261120
        %v327 = vsel %vm326, %v323, 0.0
        %328 = vadd.xlane.f32.xlu0 %v327
        %v329 = vpop.xlane.xlu0 %328
        %v330 = vrcp.pop 32.0
        %v331 = vmul.f32 %v329, %v330
        %v332 = vsub.f32 %v323, %v331
        %v333 = vmul.f32 %v332, %v332
        %v334 = vsel %vm326, %v333, 0.0
        %335 = vadd.xlane.f32.xlu0 %v334
        %v336 = vpop.xlane.xlu0 %335
        %v337 = vrcp.pop 31.0
        %v338 = vmul.f32 %v336, %v337
        %v339 = vrsqrt.pop %v338
        %v340 = vmul.f32 %v338, %v339
        %vm341 = vcmp.eq.f32.partialorder %v338, inf
        %v342 = vsel %vm341, %v338, %v340
        %vm343 = vcmp.eq.f32.partialorder %v338, 0.0
        %v344 = vand.u32 %v338, 2147483648
        %v345 = vsel %vm343, %v344, %v342
        %v347 = vlaneseq
        %v348 = vshrl.u32 %v347, 7
        %v349 = vsub.s32 0, %v348
        %v350 = vrot.slane %v324, %v349
        %v352 = vmul.f32 %v350, %v332
        %v353 = vadd.f32 %v345, 1e-06
        %v354 = vrcp.pop %v353
        %v355 = vmul.f32 %v352, %v354
        %v357 = vlaneseq
        %v358 = vshrl.u32 %v357, 7
        %v359 = vsub.s32 0, %v358
        %v360 = vrot.slane %v325, %v359
        %v362 = vadd.f32 %v355, %v360
        %v363 = vpack.c.bf16 %v362, %v362
        %v364 = vld [vmem:[#allocation5] sm:$0xf]
        %v365 = vld [vmem:[#allocation5 + $0x4] sm:$0xf]
        %v366 = vld [vmem:[#allocation5 + $0x8] sm:$0xf]
        %v367 = vld [vmem:[#allocation5 + $0xc] sm:$0xf]
        %v372 = vunpack.c.l.b16 %v364
        %v373 = vunpack.c.l.b16 %v365
        %v374 = vunpack.c.l.b16 %v366
        %v375 = vunpack.c.l.b16 %v367
        %v376 = vpack.c.b16 %v373, %v372
        %v377 = vpack.c.b16 %v375, %v374
        %v381 = vsel %vm326, %v363, 0
        %383 = vmatprep.subr.bf16.mxu0 0
        %384 = vmatpush1.bf16.msra.mxu0 0
        %385 = vmatprep.subr.bf16.mxu0 0
        %386 = vmatpush1.bf16.msra.mxu0 0
        %387 = vmatprep.subr.bf16.mxu0 0
        %388 = vmatpush1.bf16.msra.mxu0 0
        %389 = vmatprep.subr.bf16.mxu0 0
        %390 = vmatpush1.bf16.msra.mxu0 0
        %391 = vmatprep.subr.bf16.mxu0 0
        %392 = vmatpush1.bf16.msra.mxu0 0
        %393 = vmatprep.subr.bf16.mxu0 0
        %394 = vmatpush1.bf16.msra.mxu0 0
        %395 = vmatprep.subr.bf16.mxu0 0
        %396 = vmatpush1.bf16.msra.mxu0 %v377
        %397 = vmatprep.subr.bf16.mxu0 0
        %398 = vmatpush1.bf16.msra.mxu0 %v376
        %399 = vmatprep.subr.bf16.mxu0 0
        %400 = vmatpush2.bf16.msra.mxu0 0
        %401 = vmatprep.subr.bf16.mxu0 0
        %402 = vmatpush2.bf16.msra.mxu0 0
        %403 = vmatprep.subr.bf16.mxu0 0
        %404 = vmatpush2.bf16.msra.mxu0 0
        %405 = vmatprep.subr.bf16.mxu0 0
        %406 = vmatpush2.bf16.msra.mxu0 0
        %407 = vmatprep.subr.bf16.mxu0 0
        %408 = vmatpush2.bf16.msra.mxu0 0
        %409 = vmatprep.subr.bf16.mxu0 0
        %410 = vmatpush2.bf16.msra.mxu0 0
        %411 = vmatprep.subr.bf16.mxu0 0
        %412 = vmatpush2.bf16.msra.mxu0 0
        %413 = vmatprep.subr.bf16.mxu0 0
        %414 = vmatpush2.bf16.msra.mxu0 0
        %415 = vmatprep.mubr.bf16.mxu0 0
        %416 = vmatmul.mubr.bf16.gmra.mxu0 %v381
        %v417 = vpop.f32.mrf.mxu0
        %v418 = vadd.f32 0.0, %v417
        %v419 = vpop.f32.mrf.mxu0
        %v420 = vpop.f32.mrf.mxu0
        %v421 = vpop.f32.mrf.mxu0
        %422 = vdwg.mxu0
        %v423 = vpack.c.bf16 %v418, %v418
        %vm424 = vcmask 257024
        %425 = vst.msk [vmem:[%s307] sm:$0xf] %vm424, %v423
        %v427 = vunpack.c.l.b16 %v423
        %v428 = vpack.c.b16 %v427, %v427
        %429 = vrot.lane.b32.xlu0 %v428, 96
        %v430 = vpop.permute.xlu0 %429
        %432 = vst.msk [vmem:[%s314] sm:$0xf] %vm424, %v430
        %433 = vrot.lane.b32.xlu0 %v428, 64
        %v434 = vpop.permute.xlu0 %433
        %436 = vst.msk [vmem:[%s321] sm:$0xf] %vm424, %v434
        %s437 = sand.u32 %s141, 1
        %s438 = scalar_lea.sflag [#allocation4], %s437
        %s439 = sand.u32 %s141, 1
        %s440 = smul.addr %s439, 4
        %s441 = scalar_lea.vmem [#allocation7], %s440
        %s442 = sand.u32 %s28, 1
        %s443 = scalar_lea.sflag [#allocation9], %s442
        %s444 = sand.u32 %s169, 1
        %s445 = smul.addr %s444, 4
        %s446 = scalar_lea.vmem [#allocation8], %s445
        %s447 = sand.u32 %s28, 1
        %s448 = scalar_lea.sflag [#allocation9], %s447
        %s449 = sand.u32 %s197, 1
        %s450 = smul.addr %s449, 4
        %s451 = scalar_lea.vmem [#allocation10], %s450
        // Predicated region
        $region45: #{tpu_custom_call.1} parent=35 // pred_check
          %p452 = pneg %p151
        $region46: #{tpu_custom_call.1} parent=35 // pred_check_branch
          %454 = sbr.rel (%p452) target = $region48
        $region47: #{tpu_custom_call.1} parent=35 // pred_region
          %s456 = ssub.s32 64, 64
          %457 = vsyncadd %s438, %s456
          %s458 = smul.addr %s32, 2
          %s459 = sadd.s32 %s33, %s458
          %s460 = smul.addr %s459, 64
          %s461 = scalar_lea.hbm %s4, %s460
          %s463 = sshll.u32 %s441, 4
          %s464 = int_to_ptr.vmem [resolvable:$true] %s463
          %466 = dma.vmem_to_hbm [thread:$0]  %s464, 64, %s461, %s438
        $region48: #{tpu_custom_call.1} parent=35 // pred_fallthru
          _
        // Predicated region
        $region49: #{tpu_custom_call.1} parent=35 // pred_check
          %p467 = pneg %p179
        $region50: #{tpu_custom_call.1} parent=35 // pred_check_branch
          %469 = sbr.rel (%p467) target = $region52
        $region51: #{tpu_custom_call.1} parent=35 // pred_region
          %s471 = ssub.s32 64, 64
          %472 = vsyncadd %s443, %s471
          %s473 = smul.addr %s32, 2
          %s474 = sadd.s32 %s33, %s473
          %s475 = smul.addr %s474, 64
          %s476 = scalar_lea.hbm %s5, %s475
          %s478 = sshll.u32 %s446, 4
          %s479 = int_to_ptr.vmem [resolvable:$true] %s478
          %481 = dma.vmem_to_hbm [thread:$0]  %s479, 64, %s476, %s443
        $region52: #{tpu_custom_call.1} parent=35 // pred_fallthru
          _
        // Predicated region
        $region53: #{tpu_custom_call.1} parent=35 // pred_check
          %p482 = pneg %p207
        $region54: #{tpu_custom_call.1} parent=35 // pred_check_branch
          %484 = sbr.rel (%p482) target = $region56
        $region55: #{tpu_custom_call.1} parent=35 // pred_region
          %s486 = ssub.s32 64, 64
          %487 = vsyncadd %s448, %s486
          %s488 = smul.addr %s32, 2
          %s489 = sadd.s32 %s33, %s488
          %s490 = smul.addr %s489, 64
          %s491 = scalar_lea.hbm %s6, %s490
          %s493 = sshll.u32 %s451, 4
          %s494 = int_to_ptr.vmem [resolvable:$true] %s493
          %496 = dma.vmem_to_hbm [thread:$0]  %s494, 64, %s491, %s448
        $region56: #{tpu_custom_call.1} parent=35 // pred_fallthru
          _
      $region36: #{tpu_custom_call.1} parent=5 // pred_fallthru
        _
      %p497 = scmp.le.s32.totalorder 2, %s23
      // Predicated region
      $region57: #{tpu_custom_call.1} parent=5 // pred_check
        %p498 = pneg %p497
      $region58: #{tpu_custom_call.1} parent=5 // pred_check_branch
        %500 = sbr.rel (%p498) target = $region60
      $region59: #{tpu_custom_call.1} parent=5 // pred_region
        %s501 = ssub.s32 %s23, 2
        // Predicated region
        $region61: #{tpu_custom_call.1} parent=59 // pred_check
          %p502 = pneg %p157
        $region62: #{tpu_custom_call.1} parent=59 // pred_check_branch
          %504 = sbr.rel (%p502) target = $region64
        $region63: #{tpu_custom_call.1} parent=59 // pred_region
          %s505 = sand.u32 %s142, 1
          %s506 = scalar_lea.sflag [#allocation4], %s505
          %s507 = sand.u32 %s142, 1
          %s508 = smul.addr %s507, 4
          %s509 = scalar_lea.vmem [#allocation7], %s508
          %510 = dma.done %s506, 64
        $region64: #{tpu_custom_call.1} parent=59 // pred_fallthru
          _
        // Predicated region
        $region65: #{tpu_custom_call.1} parent=59 // pred_check
          %p511 = pneg %p185
        $region66: #{tpu_custom_call.1} parent=59 // pred_check_branch
          %513 = sbr.rel (%p511) target = $region68
        $region67: #{tpu_custom_call.1} parent=59 // pred_region
          %s514 = sand.u32 %s29, 1
          %s515 = scalar_lea.sflag [#allocation9], %s514
          %s516 = sand.u32 %s170, 1
          %s517 = smul.addr %s516, 4
          %s518 = scalar_lea.vmem [#allocation8], %s517
          %519 = dma.done %s515, 64
        $region68: #{tpu_custom_call.1} parent=59 // pred_fallthru
          _
        // Predicated region
        $region69: #{tpu_custom_call.1} parent=59 // pred_check
          %p520 = pneg %p213
        $region70: #{tpu_custom_call.1} parent=59 // pred_check_branch
          %522 = sbr.rel (%p520) target = $region72
        $region71: #{tpu_custom_call.1} parent=59 // pred_region
          %s523 = sand.u32 %s29, 1
          %s524 = scalar_lea.sflag [#allocation9], %s523
          %s525 = sand.u32 %s198, 1
          %s526 = smul.addr %s525, 4
          %s527 = scalar_lea.vmem [#allocation10], %s526
          %528 = dma.done %s524, 64
        $region72: #{tpu_custom_call.1} parent=59 // pred_fallthru
          _
      $region60: #{tpu_custom_call.1} parent=5 // pred_fallthru
        _
    $region6: #{tpu_custom_call.1} parent=1 // loop_footer
      %s27 = sadd.s32 1, %s23
    $region7: #{tpu_custom_call.1} parent=1 // loop_footer_branch
      %22 = sbr.rel target = $region3
    $region8: #{tpu_custom_call.1} parent=1 // loop_exit
      _
    %529 = vsyncpa [#allocation3], 1
    %s530 = scalar_lea.sflag [#allocation3], 1
    %531 = vsyncpa %s530, 1
    %532 = vsyncpa [#allocation6], 1
    %533 = vsyncpa [#allocation4], 1
    %s534 = scalar_lea.sflag [#allocation4], 1
    %535 = vsyncpa %s534, 1
    %536 = vsyncpa [#allocation9], 1
    %s537 = scalar_lea.sflag [#allocation9], 1
    %538 = vsyncpa %s537, 1

</llo_original>
